<compile_context>
chip_gen: v7x
topology: tpu7x:2x2x1
jax: 0.10.0
libtpu: 0.0.40
codegen_flags: <defaults>
</compile_context>

<pallas_src>
import functools

import jax
import jax.numpy as jnp
from jax import lax
from jax.experimental import pallas as pl
from jax.experimental.pallas import tpu as pltpu

_MiB = 1024 * 1024


# --------------------------------------------------------------------------- #
# Tile / budget selection
# --------------------------------------------------------------------------- #
def _divisors(n):
    ds = set()
    i = 1
    while i * i <= n:
        if n % i == 0:
            ds.add(i)
            ds.add(n // i)
        i += 1
    return sorted(ds)


def _vmem_capacity_bytes():
    try:
        return int(pltpu.get_tpu_info().vmem_capacity_bytes)
    except Exception:
        return 64 * _MiB  # conservative (v7x-sized) fallback


def _budgets(block_budget_override, vmem_limit_override):
    cap = _vmem_capacity_bytes()
    if cap >= 100 * _MiB:          # v5e / v6e: 128 MiB physical VMEM
        block_budget = 14 * _MiB
        vmem_limit = 96 * _MiB
    else:                          # v7x: 64 MiB per-TC VMEM
        block_budget = 8 * _MiB
        vmem_limit = 44 * _MiB
    if block_budget_override is not None:
        block_budget = int(block_budget_override)
    if vmem_limit_override is not None:
        vmem_limit = int(vmem_limit_override)
    return block_budget, vmem_limit


def _choose_tiles(B_pad, F, T, itemsize, block_budget, min_batch_blocks):
    """Pick (TB, TC) with TB a multiple of 8 (or full B_pad) and TC either the
    full T or a multiple of 128, sized so TB*F*TC*itemsize ~ block_budget."""
    if B_pad % 8 == 0:
        tb_cands = [d for d in _divisors(B_pad) if d % 8 == 0]
    else:
        tb_cands = [B_pad]  # small / unpadded batch: full-extent block
    allowed = [tb for tb in tb_cands if B_pad // tb >= min_batch_blocks]
    if not allowed:
        allowed = [min(tb_cands)]

    best = None
    for tb in allowed:
        cols = block_budget // max(tb * F * itemsize, 1)
        if T <= cols or T <= 128:
            tc = T
        else:
            tc = max(128, (cols // 128) * 128)
        blk = tb * F * tc * itemsize
        key = (min(blk, block_budget), tc, tb)
        if best is None or key > best[0]:
            best = (key, tb, tc)
    return best[1], best[2]


# --------------------------------------------------------------------------- #
# Kernel
# --------------------------------------------------------------------------- #
def _tstp_kernel(x_ref, out_ref, mean_acc, m2_acc, *, F, T, TC, inv_tm1,
                 needs_mask):
    # x_ref:    (TB, F, TC)  one time chunk for TB batch rows (native dtype)
    # out_ref:  (TB, 2F)     [mean | std], written at the last time chunk
    # mean_acc: (TB, F) f32  running mean
    # m2_acc:   (TB, F) f32  running sum of squared deviations
    t = pl.program_id(1)

    @pl.when(t == 0)
    def _init():
        mean_acc[...] = jnp.zeros_like(mean_acc)
        m2_acc[...] = jnp.zeros_like(m2_acc)

    # Single pass over the chunk, shifted by the running mean estimate s
    # (so c1 ~= 0 and the c2 - c1^2/n correction stays well conditioned).
    x = x_ref[...].astype(jnp.float32)               # (TB, F, TC)
    s = mean_acc[...]                                # (TB, F)
    y = x - s[..., None]
    if needs_mask:
        valid = jnp.minimum(T - t * TC, TC)          # scalar: tail-chunk length
        col = lax.broadcasted_iota(jnp.int32, y.shape, 2)
        y = jnp.where(col < valid, y, 0.0)
        n_b = valid.astype(jnp.float32)
    else:
        n_b = jnp.float32(TC)

    c1 = jnp.sum(y, axis=-1)                         # (TB, F)
    c2 = jnp.sum(y * y, axis=-1)                     # (TB, F)

    # Chunked-Welford / Chan merge; all coefficients are scalars.
    n_a = (t * TC).astype(jnp.float32)               # elements seen so far
    inv_n = 1.0 / (n_a + n_b)                        # scalar reciprocal
    mean_acc[...] = s + c1 * inv_n
    m2_acc[...] = m2_acc[...] + (c2 - (c1 * c1) * inv_n)

    @pl.when(t == pl.num_programs(1) - 1)
    def _finalize():
        mean = mean_acc[...]
        var = m2_acc[...] * inv_tm1                  # unbiased, like torch.var
        std = jnp.sqrt(var + 1e-7)
        out_ref[:, :F] = mean.astype(out_ref.dtype)
        out_ref[:, F:] = std.astype(out_ref.dtype)


# --------------------------------------------------------------------------- #
# Wrapper
# --------------------------------------------------------------------------- #
def tstp(x, *, block_budget_bytes=None, vmem_limit_bytes=None):
    """Temporal statistics pooling: x (B, F, T) -> (B, 2*F) = [mean | std]."""
    B, F, T = x.shape
    itemsize = jnp.dtype(x.dtype).itemsize
    block_budget, vmem_limit = _budgets(block_budget_bytes, vmem_limit_bytes)

    # Pad awkward batch sizes up to a multiple of 8 instead of degenerate TB=1.
    B_pad = B
    if B > 8 and B % 8 != 0:
        full_block_fits = B * F * min(T, 128) * itemsize <= block_budget
        if not full_block_fits:
            B_pad = ((B + 7) // 8) * 8

    # Keep >= 2 blocks on the parallel batch axis when possible (v7x megacore).
    min_batch_blocks = 2 if (B_pad % 8 == 0 and B_pad >= 16) else 1
    TB, TC = _choose_tiles(B_pad, F, T, itemsize, block_budget, min_batch_blocks)
    grid = (B_pad // TB, pl.cdiv(T, TC))
    needs_mask = (T % TC) != 0

    x_in = x
    if B_pad != B:
        x_in = jnp.pad(x, ((0, B_pad - B), (0, 0), (0, 0)))

    # torch.var(unbiased=True) with a single sample is NaN; reproduce that.
    inv_tm1 = (1.0 / (T - 1)) if T > 1 else float("nan")

    kernel = functools.partial(_tstp_kernel, F=F, T=T, TC=TC,
                               inv_tm1=inv_tm1, needs_mask=needs_mask)

    out = pl.pallas_call(
        kernel,
        out_shape=jax.ShapeDtypeStruct((B_pad, 2 * F), x.dtype),
        grid_spec=pltpu.PrefetchScalarGridSpec(
            num_scalar_prefetch=0,
            grid=grid,
            in_specs=[pl.BlockSpec((TB, F, TC), lambda b, t: (b, 0, t))],
            out_specs=pl.BlockSpec((TB, 2 * F), lambda b, t: (b, 0)),
            scratch_shapes=[
                pltpu.VMEM((TB, F), jnp.float32),   # running mean
                pltpu.VMEM((TB, F), jnp.float32),   # running M2
            ],
        ),
        compiler_params=pltpu.CompilerParams(
            dimension_semantics=("parallel", "arbitrary"),
            vmem_limit_bytes=vmem_limit,
        ),
        cost_estimate=pl.CostEstimate(
            flops=4 * B * F * T,
            transcendentals=B * F,
            bytes_accessed=B * F * T * itemsize + 2 * B * F * itemsize,
        ),
    )(x_in)

    if B_pad != B:
        out = out[:B]
    return out


def tstp_ref(x):
    """Pure-JAX reference mirroring the PyTorch forward."""
    mean = jnp.mean(x, axis=-1)
    var = jnp.var(x, axis=-1, ddof=1)                # unbiased, like torch.var
    std = jnp.sqrt(var + 1e-7)
    return jnp.concatenate([mean, std], axis=1)


if __name__ == "__main__":
    key = jax.random.PRNGKey(0)

    # Test A — small shape matching the module convention (B, F, T):
    # single-tile path (TB=B, TC=T, grid=(1,1)).
    B, F, T = 2, 16, 32
    x = jax.random.normal(key, (B, F, T), dtype=jnp.float32)
    out = jax.block_until_ready(tstp(x))
    ref = tstp_ref(x)
    assert out.shape == (B, 2 * F), out.shape
    assert jnp.allclose(out, ref, atol=1e-5, rtol=1e-5), (
        float(jnp.max(jnp.abs(out - ref))))

    # Test B — time-chunked accumulation with a masked tail chunk
    # (TC=128, grid=(1,3), last chunk has 77 valid columns) and a non-zero
    # mean to stress the shifted single-pass stability.
    B2, F2, T2 = 8, 128, 333
    x2 = (jax.random.normal(jax.random.PRNGKey(1), (B2, F2, T2),
                            dtype=jnp.float32) * 3.0 + 5.0)
    out2 = jax.block_until_ready(tstp(x2, block_budget_bytes=600_000))
    ref2 = tstp_ref(x2)
    assert out2.shape == (B2, 2 * F2), out2.shape
    assert jnp.allclose(out2, ref2, atol=1e-4, rtol=1e-4), (
        float(jnp.max(jnp.abs(out2 - ref2))))

    # Test C — awkward batch (B=10): padded to 16, TB=8, two parallel batch
    # blocks and two time chunks; output sliced back to B rows.
    B3, F3, T3 = 10, 128, 256
    x3 = (jax.random.normal(jax.random.PRNGKey(2), (B3, F3, T3),
                            dtype=jnp.float32) * 2.0 - 1.5)
    out3 = jax.block_until_ready(tstp(x3, block_budget_bytes=600_000))
    ref3 = tstp_ref(x3)
    assert out3.shape == (B3, 2 * F3), out3.shape
    assert jnp.allclose(out3, ref3, atol=1e-4, rtol=1e-4), (
        float(jnp.max(jnp.abs(out3 - ref3))))

    print("KERNEL_OK")
</pallas_src>

<mosaic_0001>
module attributes {stable_mosaic.version = 11 : i64} {
  func.func @_tstp_kernel(%arg0: i32, %arg1: i32, %arg2: memref<2x16x32xf32, #tpu.memory_space<vmem>>, %arg3: memref<2x32xf32, #tpu.memory_space<vmem>>, %arg4: memref<2x16xf32, #tpu.memory_space<vmem>>, %arg5: memref<2x16xf32, #tpu.memory_space<vmem>>) attributes {dimension_semantics = [#tpu.dimension_semantics<parallel>, #tpu.dimension_semantics<arbitrary>], iteration_bounds = array<i64: 1, 1>, scalar_prefetch = 0 : i64, scratch_operands = 2 : i64, tpu.core_type = #tpu.core_type<tc>, window_params = [{transform_indices = @transform_0, window_bounds = array<i64: 2, 16, 32>}, {transform_indices = @transform_1, window_bounds = array<i64: 2, 32>}]} {
    %c0_i32 = arith.constant 0 : i32
    %0 = arith.cmpi eq, %arg1, %c0_i32 : i32
    %1 = arith.extui %0 : i1 to i32
    %c0_i32_0 = arith.constant 0 : i32
    %2 = arith.cmpi ne, %1, %c0_i32_0 : i32
    scf.if %2 {
      %cst_16 = arith.constant 0.000000e+00 : f32
      %29 = vector.broadcast %cst_16 : f32 to vector<2x16xf32>
      %c0_17 = arith.constant 0 : index
      %c0_18 = arith.constant 0 : index
      %30 = vector.load %arg4[%c0_17, %c0_18] : memref<2x16xf32, #tpu.memory_space<vmem>>, vector<2x16xf32>
      tpu.vector_store %arg4[%c0_17, %c0_18], %29 {strides = array<i32>} : memref<2x16xf32, #tpu.memory_space<vmem>>, vector<2x16xf32>,
      %cst_19 = arith.constant 0.000000e+00 : f32
      %31 = vector.broadcast %cst_19 : f32 to vector<2x16xf32>
      %c0_20 = arith.constant 0 : index
      %c0_21 = arith.constant 0 : index
      %32 = vector.load %arg5[%c0_20, %c0_21] : memref<2x16xf32, #tpu.memory_space<vmem>>, vector<2x16xf32>
      tpu.vector_store %arg5[%c0_20, %c0_21], %31 {strides = array<i32>} : memref<2x16xf32, #tpu.memory_space<vmem>>, vector<2x16xf32>,
    } else {
    }
    %c0 = arith.constant 0 : index
    %c0_1 = arith.constant 0 : index
    %c0_2 = arith.constant 0 : index
    %3 = vector.load %arg2[%c0, %c0_1, %c0_2] : memref<2x16x32xf32, #tpu.memory_space<vmem>>, vector<2x16x32xf32>
    %c0_3 = arith.constant 0 : index
    %c0_4 = arith.constant 0 : index
    %4 = vector.load %arg4[%c0_3, %c0_4] : memref<2x16xf32, #tpu.memory_space<vmem>>, vector<2x16xf32>
    %5 = vector.shape_cast %4 : vector<2x16xf32> to vector<2x16x1xf32>
    %6 = vector.broadcast %5 : vector<2x16x1xf32> to vector<2x16x32xf32>
    %7 = arith.subf %3, %6 : vector<2x16x32xf32>
    %cst = arith.constant dense<0.000000e+00> : vector<2x16xf32>
    %8 = vector.multi_reduction <add>, %7, %cst [2] : vector<2x16x32xf32> to vector<2x16xf32>
    %9 = arith.mulf %7, %7 : vector<2x16x32xf32>
    %cst_5 = arith.constant dense<0.000000e+00> : vector<2x16xf32>
    %10 = vector.multi_reduction <add>, %9, %cst_5 [2] : vector<2x16x32xf32> to vector<2x16xf32>
    %c32_i32 = arith.constant 32 : i32
    %11 = arith.muli %arg1, %c32_i32 : i32
    %12 = arith.sitofp %11 : i32 to f32
    %cst_6 = arith.constant 3.200000e+01 : f32
    %13 = arith.addf %12, %cst_6 : f32
    %cst_7 = arith.constant 1.000000e+00 : f32
    %14 = arith.divf %cst_7, %13 : f32
    %15 = vector.broadcast %14 : f32 to vector<2x16xf32>
    %16 = arith.mulf %8, %15 : vector<2x16xf32>
    %17 = arith.addf %4, %16 : vector<2x16xf32>
    %c0_8 = arith.constant 0 : index
    %c0_9 = arith.constant 0 : index
    %18 = vector.load %arg4[%c0_8, %c0_9] : memref<2x16xf32, #tpu.memory_space<vmem>>, vector<2x16xf32>
    tpu.vector_store %arg4[%c0_8, %c0_9], %17 {strides = array<i32>} : memref<2x16xf32, #tpu.memory_space<vmem>>, vector<2x16xf32>,
    %c0_10 = arith.constant 0 : index
    %c0_11 = arith.constant 0 : index
    %19 = vector.load %arg5[%c0_10, %c0_11] : memref<2x16xf32, #tpu.memory_space<vmem>>, vector<2x16xf32>
    %20 = arith.mulf %8, %8 : vector<2x16xf32>
    %21 = vector.broadcast %14 : f32 to vector<2x16xf32>
    %22 = arith.mulf %20, %21 : vector<2x16xf32>
    %23 = arith.subf %10, %22 : vector<2x16xf32>
    %24 = arith.addf %19, %23 : vector<2x16xf32>
    %c0_12 = arith.constant 0 : index
    %c0_13 = arith.constant 0 : index
    %25 = vector.load %arg5[%c0_12, %c0_13] : memref<2x16xf32, #tpu.memory_space<vmem>>, vector<2x16xf32>
    tpu.vector_store %arg5[%c0_12, %c0_13], %24 {strides = array<i32>} : memref<2x16xf32, #tpu.memory_space<vmem>>, vector<2x16xf32>,
    %c0_i32_14 = arith.constant 0 : i32
    %26 = arith.cmpi eq, %arg1, %c0_i32_14 : i32
    %27 = arith.extui %26 : i1 to i32
    %c0_i32_15 = arith.constant 0 : i32
    %28 = arith.cmpi ne, %27, %c0_i32_15 : i32
    scf.if %28 {
      %c0_16 = arith.constant 0 : index
      %c0_17 = arith.constant 0 : index
      %29 = vector.load %arg4[%c0_16, %c0_17] : memref<2x16xf32, #tpu.memory_space<vmem>>, vector<2x16xf32>
      %c0_18 = arith.constant 0 : index
      %c0_19 = arith.constant 0 : index
      %30 = vector.load %arg5[%c0_18, %c0_19] : memref<2x16xf32, #tpu.memory_space<vmem>>, vector<2x16xf32>
      %cst_20 = arith.constant 0.0322580636 : f32
      %31 = vector.broadcast %cst_20 : f32 to vector<2x16xf32>
      %32 = arith.mulf %30, %31 : vector<2x16xf32>
      %cst_21 = arith.constant 1.000000e-07 : f32
      %33 = vector.broadcast %cst_21 : f32 to vector<2x16xf32>
      %34 = arith.addf %32, %33 : vector<2x16xf32>
      %35 = math.sqrt %34 : vector<2x16xf32>
      %c0_22 = arith.constant 0 : index
      %c0_23 = arith.constant 0 : index
      %36 = vector.load %arg3[%c0_22, %c0_23] : memref<2x32xf32, #tpu.memory_space<vmem>>, vector<2x16xf32>
      tpu.vector_store %arg3[%c0_22, %c0_23], %29 {strides = array<i32>} : memref<2x32xf32, #tpu.memory_space<vmem>>, vector<2x16xf32>,
      %c0_24 = arith.constant 0 : index
      %c16 = arith.constant 16 : index
      %37 = vector.load %arg3[%c0_24, %c16] : memref<2x32xf32, #tpu.memory_space<vmem>>, vector<2x16xf32>
      tpu.vector_store %arg3[%c0_24, %c16], %35 {strides = array<i32>} : memref<2x32xf32, #tpu.memory_space<vmem>>, vector<2x16xf32>,
    } else {
    }
    return
  }
  func.func @transform_0(%arg0: i32, %arg1: i32) -> (i32, i32, i32) {
    %c0_i32 = arith.constant 0 : i32
    %c0_i32_0 = arith.constant 0 : i32
    return %arg0, %c0_i32, %arg1 : i32, i32, i32
  }
  func.func @transform_1(%arg0: i32, %arg1: i32) -> (i32, i32) {
    %c0_i32 = arith.constant 0 : i32
    %c0_i32_0 = arith.constant 0 : i32
    return %arg0, %c0_i32 : i32, i32
  }
}

</mosaic_0001>

<llo_original>
// kernel: tpu_custom_call.1
$region0: #{tpu_custom_call.1}
  #allocation0 [shape = 'u32[]', space=smem, size = 0x4, offset = 0x4, fixed_abs, tag = 'smem constant byte address 0x4 - core index']
  #allocation1 [shape = 'u32[144,128]{1,0:T(1,128)}', space=vmem, size = 0x12000, scoped, tag = 'internal scratch']
  #allocation2 [shape = 'f32[2,16]{1,0:T(2,128)}', space=vmem, size = 0x400, scoped, tag = 'scratch operand']
  #allocation3 [shape = 'f32[2,16]{1,0:T(2,128)}', space=vmem, size = 0x400, scoped, tag = 'scratch operand']
  %s0 = inlined_call_operand.hbm [shape: f32[2,16,32], index: 0, kind: input, shape index: {}]
  %s1 = inlined_call_operand.hbm [shape: f32[2,32], index: 1, kind: output, shape index: {}]
  %s2 = sld [smem:[#allocation0]]
  $region26: #{tpu_custom_call.1} parent=0
    _
  %s4 = ssub.s32 1, %s2
  %s5 = scalar_select 0, %s4, %s2
  $region1: #{tpu_custom_call.1} parent=0
    #allocation4 [shape = 'u8[16384]{0}', space=vmem, size = 0x4000, scoped, tag = 'input window, operand 0, single buffered']
    #allocation5 [shape = 's32[1]{0}', space=sflag, size = 0x4, scoped, tag = 'scoped memory for tpu_custom_call.1']
    #allocation6 [shape = 's32[1]{0}', space=sflag, size = 0x4, scoped, tag = 'scoped memory for tpu_custom_call.1']
    #allocation7 [shape = 'u8[1024]{0}', space=vmem, size = 0x400, scoped, tag = 'output window, operand 0, single buffered']
    %6 = vsyncpa [#allocation5], 0
    %7 = vsyncpa [#allocation6], 0
    // Predicated region
    $region2: #{tpu_custom_call.1} parent=1 // pred_check
      _
    $region3: #{tpu_custom_call.1} parent=1 // pred_check_branch
      %9 = sbr.rel (0) target = $region5
    $region4: #{tpu_custom_call.1} parent=1 // pred_region
      %s11 = ssub.s32 512, 512
      %12 = vsyncadd [#allocation5], %s11
      %s13 = sshll.u32 [#allocation4], 4
      %s14 = int_to_ptr.vmem [resolvable:$true] %s13
      %19 = dma.hbm_to_vmem [thread:$0]  %s0, 512, %s14, [#allocation5], 128, 128, 8
    $region5: #{tpu_custom_call.1} parent=1 // pred_fallthru
      _
    // Predicated region
    $region6: #{tpu_custom_call.1} parent=1 // pred_check
      _
    $region7: #{tpu_custom_call.1} parent=1 // pred_check_branch
      %21 = sbr.rel (0) target = $region9
    $region8: #{tpu_custom_call.1} parent=1 // pred_region
      %22 = dma.done [#allocation5], 512
    $region9: #{tpu_custom_call.1} parent=1 // pred_fallthru
      _
    %p23 = scmp.eq.s32.totalorder 0, 0
    // Predicated region
    $region10: #{tpu_custom_call.1} parent=1 // pred_check
      %p24 = pneg %p23
    $region11: #{tpu_custom_call.1} parent=1 // pred_check_branch
      %26 = sbr.rel (%p24) target = $region13
    $region12: #{tpu_custom_call.1} parent=1 // pred_region
      %vm27 = vcmask 123904
      %28 = vst.msk [vmem:[#allocation2] sm:$0x3] %vm27, 0.0
      %29 = vst.msk [vmem:[#allocation3] sm:$0x3] %vm27, 0.0
    $region13: #{tpu_custom_call.1} parent=1 // pred_fallthru
      _
    %v30 = vld [vmem:[#allocation4] sm:$0xff]
    %v31 = vld [vmem:[#allocation4 + $0x8] sm:$0xff]
    %v32 = vld [vmem:[#allocation4 + $0x10] sm:$0xff]
    %v33 = vld [vmem:[#allocation4 + $0x18] sm:$0xff]
    %v34 = vld [vmem:[#allocation2] sm:$0x3]
    %v35 = vlaneseq
    %v36 = vshrl.u32 %v35, 7
    %v37 = vsub.s32 0, %v36
    %v38 = vrot.slane %v34, %v37
    %40 = vbcast.lane.b32.xlu0 %v38, 256
    %v41 = vpop.permute.xlu0 %40
    %s43 = sor.u32 256, 8
    %44 = vbcast.lane.b32.xlu0 %v38, %s43
    %v45 = vpop.permute.xlu0 %44
    %v46 = vlaneseq
    %v47 = vshrl.u32 %v46, 7
    %v48 = vsub.s32 1, %v47
    %v49 = vrot.slane %v34, %v48
    %51 = vbcast.lane.b32.xlu0 %v49, 256
    %v52 = vpop.permute.xlu0 %51
    %s54 = sor.u32 256, 8
    %55 = vbcast.lane.b32.xlu0 %v49, %s54
    %v56 = vpop.permute.xlu0 %55
    %v57 = vsub.f32 %v30, %v41
    %v58 = vsub.f32 %v31, %v45
    %v59 = vsub.f32 %v32, %v52
    %v60 = vsub.f32 %v33, %v56
    %vm61 = vcmask 261120
    %v62 = vsel %vm61, %v57, 0.0
    %63 = vadd.xlane.f32.xlu0 %v62
    %v64 = vpop.xlane.xlu0 %63
    %v65 = vsel %vm61, %v58, 0.0
    %66 = vadd.xlane.f32.xlu0 %v65
    %v67 = vpop.xlane.xlu0 %66
    %v68 = vsel %vm61, %v59, 0.0
    %69 = vadd.xlane.f32.xlu0 %v68
    %v70 = vpop.xlane.xlu0 %69
    %v71 = vsel %vm61, %v60, 0.0
    %72 = vadd.xlane.f32.xlu0 %v71
    %v73 = vpop.xlane.xlu0 %72
    %v74 = vmul.f32 %v57, %v57
    %v75 = vmul.f32 %v58, %v58
    %v76 = vmul.f32 %v59, %v59
    %v77 = vmul.f32 %v60, %v60
    %v78 = vsel %vm61, %v74, 0.0
    %79 = vadd.xlane.f32.xlu0 %v78
    %v80 = vpop.xlane.xlu0 %79
    %v81 = vsel %vm61, %v75, 0.0
    %82 = vadd.xlane.f32.xlu0 %v81
    %v83 = vpop.xlane.xlu0 %82
    %v84 = vsel %vm61, %v76, 0.0
    %85 = vadd.xlane.f32.xlu0 %v84
    %v86 = vpop.xlane.xlu0 %85
    %v87 = vsel %vm61, %v77, 0.0
    %88 = vadd.xlane.f32.xlu0 %v87
    %v89 = vpop.xlane.xlu0 %88
    %s90 = smul.u32 0, 32
    %s91 = scvt.s32.f32 %s90
    %s92 = sadd.f32 %s91, 32.0
    %v93 = vstv %s92
    %v94 = vrcp.pop %v93
    %s95 = vtos %v94
    %v96 = vstv %s95
    %v97 = vmul.f32 %v64, %v96
    %v98 = vmul.f32 %v67, %v96
    %v99 = vmul.f32 %v70, %v96
    %v100 = vmul.f32 %v73, %v96
    %v105 = vlaneseq
    %v106 = vand.u32 %v105, 127
    %v107 = vlaneseq
    %v108 = vshrl.u32 %v107, 7
    %v109 = vsub.s32 %v106, %v108
    %v110 = vrot.slane %v97, %v109
    %v111 = vadd.s32 %v106, 4294967288
    %v112 = vlaneseq
    %v113 = vshrl.u32 %v112, 7
    %v114 = vsub.s32 %v111, %v113
    %v115 = vrot.slane %v98, %v114
    %vm116 = vcmask 130112
    %v117 = vsel %vm116, %v115, %v110
    %v118 = vlaneseq
    %v119 = vshrl.u32 %v118, 7
    %v120 = vsub.s32 %v106, %v119
    %v121 = vrot.slane %v99, %v120
    %v122 = vlaneseq
    %v123 = vshrl.u32 %v122, 7
    %v124 = vsub.s32 %v111, %v123
    %v125 = vrot.slane %v100, %v124
    %v126 = vsel %vm116, %v125, %v121
    %vm127 = vcmask 1041409
    %v128 = vsel %vm127, %v126, %v117
    %v130 = vadd.f32 %v34, %v128
    %vm131 = vcmask 123904
    %132 = vst.msk [vmem:[#allocation2] sm:$0x3] %vm131, %v130
    %v133 = vld [vmem:[#allocation3] sm:$0x3]
    %v134 = vmul.f32 %v64, %v64
    %v135 = vmul.f32 %v67, %v67
    %v136 = vmul.f32 %v70, %v70
    %v137 = vmul.f32 %v73, %v73
    %v138 = vmul.f32 %v134, %v96
    %v139 = vmul.f32 %v135, %v96
    %v140 = vmul.f32 %v136, %v96
    %v141 = vmul.f32 %v137, %v96
    %v142 = vsub.f32 %v80, %v138
    %v143 = vsub.f32 %v83, %v139
    %v144 = vsub.f32 %v86, %v140
    %v145 = vsub.f32 %v89, %v141
    %v150 = vlaneseq
    %v151 = vshrl.u32 %v150, 7
    %v152 = vsub.s32 %v106, %v151
    %v153 = vrot.slane %v142, %v152
    %v154 = vlaneseq
    %v155 = vshrl.u32 %v154, 7
    %v156 = vsub.s32 %v111, %v155
    %v157 = vrot.slane %v143, %v156
    %v158 = vsel %vm116, %v157, %v153
    %v159 = vlaneseq
    %v160 = vshrl.u32 %v159, 7
    %v161 = vsub.s32 %v106, %v160
    %v162 = vrot.slane %v144, %v161
    %v163 = vlaneseq
    %v164 = vshrl.u32 %v163, 7
    %v165 = vsub.s32 %v111, %v164
    %v166 = vrot.slane %v145, %v165
    %v167 = vsel %vm116, %v166, %v162
    %v168 = vsel %vm127, %v167, %v158
    %v170 = vadd.f32 %v133, %v168
    %171 = vst.msk [vmem:[#allocation3] sm:$0x3] %vm131, %v170
    // Predicated region
    $region14: #{tpu_custom_call.1} parent=1 // pred_check
      %p172 = pneg %p23
    $region15: #{tpu_custom_call.1} parent=1 // pred_check_branch
      %174 = sbr.rel (%p172) target = $region17
    $region16: #{tpu_custom_call.1} parent=1 // pred_region
      %v175 = vld [vmem:[#allocation2] sm:$0x3]
      %v176 = vld [vmem:[#allocation3] sm:$0x3]
      %v177 = vmul.f32 %v176, 0.032258064
      %v178 = vadd.f32 %v177, 1e-07
      %v179 = vrsqrt.pop %v178
      %v180 = vmul.f32 %v178, %v179
      %vm181 = vcmp.eq.f32.partialorder %v178, inf
      %v182 = vsel %vm181, %v178, %v180
      %vm183 = vcmp.eq.f32.partialorder %v178, 0.0
      %v184 = vand.u32 %v178, 2147483648
      %v185 = vsel %vm183, %v184, %v182
      %186 = vst.msk [vmem:[#allocation7] sm:$0x3] %vm131, %v175
      %188 = vrot.lane.b32.xlu0 %v185, 16
      %v189 = vpop.permute.xlu0 %188
      %vm191 = vcmask 255104
      %192 = vst.msk [vmem:[#allocation7] sm:$0x3] %vm191, %v189
    $region17: #{tpu_custom_call.1} parent=1 // pred_fallthru
      _
    // Predicated region
    $region18: #{tpu_custom_call.1} parent=1 // pred_check
      _
    $region19: #{tpu_custom_call.1} parent=1 // pred_check_branch
      %194 = sbr.rel (0) target = $region21
    $region20: #{tpu_custom_call.1} parent=1 // pred_region
      %s196 = ssub.s32 32, 32
      %197 = vsyncadd [#allocation6], %s196
      %s199 = sshll.u32 [#allocation7], 4
      %s200 = int_to_ptr.vmem [resolvable:$true] %s199
      %202 = dma.vmem_to_hbm [thread:$0]  %s200, 32, %s1, [#allocation6]
    $region21: #{tpu_custom_call.1} parent=1 // pred_fallthru
      _
    // Predicated region
    $region22: #{tpu_custom_call.1} parent=1 // pred_check
      _
    $region23: #{tpu_custom_call.1} parent=1 // pred_check_branch
      %204 = sbr.rel (0) target = $region25
    $region24: #{tpu_custom_call.1} parent=1 // pred_region
      %205 = dma.done [#allocation6], 32
    $region25: #{tpu_custom_call.1} parent=1 // pred_fallthru
      _
    %206 = vsyncpa [#allocation5], 1
    %207 = vsyncpa [#allocation6], 1

</llo_original>
